<compile_context>
chip_gen: v7x
topology: tpu7x:2x2x1
jax: 0.10.0
libtpu: 0.0.40
codegen_flags: <defaults>
</compile_context>

<pallas_src>
import functools

import jax
import jax.numpy as jnp
from jax.experimental import pallas as pl
from jax.experimental.pallas import tpu as pltpu


# ------------------------- conv implicit-GEMM kernel -------------------------

def _conv_gemm_kernel(wt_ref, cols_ref, b_ref, o_ref, acc_ref, *, relu):
    # wt: (Cout, tk) bf16, cols: (tk, tn) bf16, b: (Cout, 1) f32
    # o:  (Cout, tn) f32,  acc: (Cout, tn) f32 scratch
    k = pl.program_id(1)

    @pl.when(k == 0)
    def _():
        acc_ref[...] = jnp.zeros_like(acc_ref)

    acc_ref[...] += jnp.dot(wt_ref[...], cols_ref[...],
                            preferred_element_type=jnp.float32)

    @pl.when(k == pl.num_programs(1) - 1)
    def _():
        y = acc_ref[...] + b_ref[...]          # f32 epilogue (VPU)
        if relu:
            y = jnp.maximum(y, 0.0)
        o_ref[...] = y.astype(o_ref.dtype)


def conv_gemm_bias_relu(wt_bf16, cols_bf16, bias_col, *, relu=True,
                        tn_max=512, tk_max=512):
    """Transposed implicit-GEMM conv: (Cout,K) @ (K,HW), bf16 inputs, f32 acc."""
    cout, k_dim = wt_bf16.shape
    hw = cols_bf16.shape[1]

    # Spatial (lane) tiling: lane-dense multiples of 128 on large layers,
    # full extent on the tiny late layers.
    tn = tn_max if (hw > tn_max and hw % tn_max == 0) else hw
    # K tiling only kicks in for full-size VGG widths (K up to 4608).
    tk = tk_max if (k_dim > 2 * tk_max and k_dim % tk_max == 0) else k_dim
    grid = (hw // tn, k_dim // tk)

    flops = 2 * cout * k_dim * hw
    bytes_accessed = (wt_bf16.size * 2 + cols_bf16.size * 2
                      + cout * hw * 4 + cout * 4)

    return pl.pallas_call(
        functools.partial(_conv_gemm_kernel, relu=relu),
        out_shape=jax.ShapeDtypeStruct((cout, hw), jnp.float32),
        grid_spec=pltpu.PrefetchScalarGridSpec(
            num_scalar_prefetch=0,
            grid=grid,
            in_specs=[
                pl.BlockSpec((cout, tk), lambda n, k: (0, k)),
                pl.BlockSpec((tk, tn), lambda n, k: (k, n)),
                pl.BlockSpec((cout, 1), lambda n, k: (0, 0)),
            ],
            out_specs=pl.BlockSpec((cout, tn), lambda n, k: (0, n)),
            scratch_shapes=[pltpu.VMEM((cout, tn), jnp.float32)],
        ),
        compiler_params=pltpu.CompilerParams(
            dimension_semantics=("parallel", "arbitrary"),
            vmem_limit_bytes=32 * 1024 * 1024,   # comfortably under v7x's 64 MiB
        ),
        cost_estimate=pl.CostEstimate(flops=flops, transcendentals=0,
                                      bytes_accessed=bytes_accessed),
    )(wt_bf16, cols_bf16, bias_col)


# ------------------------- fused attention head kernel -------------------------

def _attention_head_kernel(conv_flat_ref, conv_mat_ref, emb_label_ref,
                           enc_wT_ref, dec_wT_ref, w1T_ref, w2T_ref,
                           bias_ref, onehot_ref,
                           probs_ref, loss_ref, attn_ref, dens_ref,
                           *, hw, c, num_class):
    # packed biases: row 0 = decode bias (HW), row 1 = classifier b1 (C),
    # row 2 = classifier b2 (num_class)
    dec_b = bias_ref[0:1, 0:hw]
    b1 = bias_ref[1:2, 0:c]
    b2 = bias_ref[2:3, 0:num_class]

    conv_flat = conv_flat_ref[...]                                    # (1, C*HW)
    emb_feat = jnp.dot(conv_flat, enc_wT_ref[...],
                       preferred_element_type=jnp.float32)            # (1, hidden)
    emb = emb_label_ref[...] * emb_feat                               # (L, hidden)
    att_logits = jnp.dot(emb, dec_wT_ref[...],
                         preferred_element_type=jnp.float32) + dec_b  # (L, HW)

    # softmax over HW (dim 1), as in F.softmax(attention, 1)
    m = jnp.max(att_logits, axis=-1, keepdims=True)
    e = jnp.exp(att_logits - m)
    attention = e / jnp.sum(e, axis=-1, keepdims=True)
    attn_ref[...] = attention

    conv_mat = conv_mat_ref[...]                                      # (C, HW)
    # attended = attention @ conv_mat.T (contract HW; no explicit transpose)
    attended = jax.lax.dot_general(attention, conv_mat,
                                   dimension_numbers=(((1,), (1,)), ((), ())),
                                   preferred_element_type=jnp.float32)  # (L, C)
    dens_ref[...] = jnp.dot(attended, conv_mat,
                            preferred_element_type=jnp.float32)         # (L, HW)

    # classifier: Linear -> ReLU -> Linear (f32 throughout)
    h1 = jnp.maximum(jnp.dot(attended, w1T_ref[...],
                             preferred_element_type=jnp.float32) + b1, 0.0)
    score = jnp.dot(h1, w2T_ref[...],
                    preferred_element_type=jnp.float32) + b2            # (L, nc)

    # softmax(score, 1) and cross_entropy(score, target) (mean reduction)
    sm = jnp.max(score, axis=-1, keepdims=True)
    se = jnp.exp(score - sm)
    ssum = jnp.sum(se, axis=-1, keepdims=True)
    probs_ref[...] = se / ssum
    lse = sm + jnp.log(ssum)                                            # (L, 1)
    nll = lse - jnp.sum(score * onehot_ref[...], axis=-1, keepdims=True)
    loss_ref[...] = jnp.sum(nll, axis=0, keepdims=True) / nll.shape[0]  # (1, 1)


def attention_head(conv_flat, conv_mat, emb_label, enc_wT, dec_wT,
                   w1T, w2T, bias_pack, onehot):
    L = emb_label.shape[0]
    c, hw = conv_mat.shape
    num_class = w2T.shape[1]
    out_shapes = (
        jax.ShapeDtypeStruct((L, num_class), jnp.float32),  # softmax(score)
        jax.ShapeDtypeStruct((1, 1), jnp.float32),          # cross-entropy loss
        jax.ShapeDtypeStruct((L, hw), jnp.float32),         # attention
        jax.ShapeDtypeStruct((L, hw), jnp.float32),         # densified attention
    )
    return pl.pallas_call(
        functools.partial(_attention_head_kernel, hw=hw, c=c,
                          num_class=num_class),
        out_shape=out_shapes,
        in_specs=[pl.BlockSpec(memory_space=pltpu.MemorySpace.VMEM)] * 9,
        out_specs=tuple(pl.BlockSpec(memory_space=pltpu.MemorySpace.VMEM)
                        for _ in range(4)),
        compiler_params=pltpu.CompilerParams(vmem_limit_bytes=32 * 1024 * 1024),
    )(conv_flat, conv_mat, emb_label, enc_wT, dec_wT, w1T, w2T,
      bias_pack, onehot)


# ------------------------- glue (plain JAX, channels-first) -------------------------

def im2col_3x3_chw(x):
    # x: (C, H, W), 3x3 conv, pad=1, stride=1 -> (9*C, H*W).
    # K ordering is (kh, kw, cin), matching w.reshape(9*Cin, Cout) of HWIO weights.
    # TODO(synk): fold im2col (and the 2x2 maxpool epilogue) into the conv kernel
    # with in-kernel halo'd shifted views to remove the 9x HBM read amplification.
    C, H, W = x.shape
    xp = jnp.pad(x, ((0, 0), (1, 1), (1, 1)))
    cols = [xp[:, kh:kh + H, kw:kw + W].reshape(C, H * W)
            for kh in range(3) for kw in range(3)]
    return jnp.concatenate(cols, axis=0)


def maxpool2x2_chw(x):
    # TODO(synk): fuse this into the preceding conv kernel's epilogue (bandwidth save).
    C, H, W = x.shape
    return x.reshape(C, H // 2, 2, W // 2, 2).max(axis=(2, 4))


# Scaled-down VGG16 cfg 'D' features[:-1] (last maxpool dropped, 4 pools remain).
VGG_CFG = [8, 8, 'M', 16, 16, 'M', 32, 32, 32, 'M', 64, 64, 64, 'M', 64, 64, 64]


def init_params(key, num_class, hidden_dim, im_size, in_ch=3):
    keys = iter(jax.random.split(key, 64))
    base = []
    cin = in_ch
    for v in VGG_CFG:
        if v == 'M':
            base.append(('pool', None, None))
        else:
            fan_in = 9 * cin
            w = jax.random.normal(next(keys), (3, 3, cin, v), jnp.float32) * jnp.sqrt(2.0 / fan_in)
            # Pre-transpose / pre-cast once: (Cout, 9*Cin) bf16 for the MXU, f32 bias column.
            wt = w.reshape(9 * cin, v).T.astype(jnp.bfloat16)
            b = jnp.zeros((v, 1), jnp.float32)
            base.append(('conv', wt, b))
            cin = v
    C = cin
    Hf = im_size // 16
    HW = Hf * Hf

    # AttentionLayerGlobal + classifier biases, packed into one lane-aligned buffer.
    pw = max(128, ((max(HW, C, num_class) + 127) // 128) * 128)
    bias_pack = jnp.zeros((3, pw), jnp.float32)
    bias_pack = bias_pack.at[0, :HW].set(jnp.zeros((HW,), jnp.float32))        # decode bias
    bias_pack = bias_pack.at[1, :C].set(jnp.zeros((C,), jnp.float32))          # classifier b1
    bias_pack = bias_pack.at[2, :num_class].set(jnp.zeros((num_class,), jnp.float32))  # b2

    return dict(
        num_class=num_class,
        base=base,
        # AttentionLayerGlobal params (normal(0, 0.01) weights, zero biases)
        label_weights=jax.random.normal(next(keys), (num_class, hidden_dim), jnp.float32) * 0.01,
        enc_wT=jax.random.normal(next(keys), (C * HW, hidden_dim), jnp.float32) * 0.01,
        dec_wT=jax.random.normal(next(keys), (hidden_dim, HW), jnp.float32) * 0.01,
        # classifier: Linear(C, C) -> ReLU -> Linear(C, num_class)
        w1T=jax.random.normal(next(keys), (C, C), jnp.float32) * 0.01,
        w2T=jax.random.normal(next(keys), (C, num_class), jnp.float32) * 0.01,
        bias_pack=bias_pack,
    )


def attentive_det_global_forward(params, im_data_nchw, target_cls):
    # im_data is NCHW as in PyTorch; convs run channels-first (batch = 1, as the
    # reference module's view(1, -1) implies).
    assert im_data_nchw.shape[0] == 1
    x = im_data_nchw[0].astype(jnp.float32)                   # (3, H, W)
    for kind, wt, b in params['base']:
        if kind == 'pool':
            x = maxpool2x2_chw(x)
        else:
            C, H, W = x.shape
            cols = im2col_3x3_chw(x.astype(jnp.bfloat16))     # (9*C, H*W) bf16
            y = conv_gemm_bias_relu(wt, cols, b, relu=True)   # (Cout, H*W) f32
            x = y.reshape(wt.shape[0], H, W)

    # channels-first output already matches PyTorch's view(1,-1) / view(C, H*W)
    C, Hf, Wf = x.shape
    conv_mat = x.reshape(C, Hf * Wf)
    conv_flat = x.reshape(1, C * Hf * Wf)

    emb_label = jnp.take(params['label_weights'], target_cls, axis=0)   # gather (glue)
    onehot = jax.nn.one_hot(target_cls, params['num_class'], dtype=jnp.float32)

    probs, loss, attn, dens = attention_head(
        conv_flat, conv_mat, emb_label,
        params['enc_wT'], params['dec_wT'],
        params['w1T'], params['w2T'], params['bias_pack'], onehot)

    L = target_cls.shape[0]
    return probs, loss[0, 0], attn.reshape(L, Hf, Wf), dens.reshape(L, Hf, Wf)


if __name__ == "__main__":
    key = jax.random.PRNGKey(0)
    num_class, hidden_dim, im_size = 8, 32, 32   # small synthetic config
    L = 5                                        # number of positive classes / targets
    k1, k2, k3 = jax.random.split(key, 3)

    params = init_params(k1, num_class, hidden_dim, im_size)
    im_data = jax.random.normal(k2, (1, 3, im_size, im_size), jnp.float32)     # NCHW, batch=1
    target_cls = jax.random.randint(k3, (L,), 0, num_class, dtype=jnp.int32)

    probs, loss, attention, densified = attentive_det_global_forward(params, im_data, target_cls)
    jax.block_until_ready((probs, loss, attention, densified))

    Hf = im_size // 16
    assert probs.shape == (L, num_class)
    assert attention.shape == (L, Hf, Hf)
    assert densified.shape == (L, Hf, Hf)
    assert loss.shape == ()
    print("KERNEL_OK")
</pallas_src>

<mosaic_0001>
module attributes {stable_mosaic.version = 11 : i64} {
  func.func @_conv_gemm_kernel(%arg0: i32, %arg1: i32, %arg2: memref<8x27xbf16, #tpu.memory_space<vmem>>, %arg3: memref<27x512xbf16, #tpu.memory_space<vmem>>, %arg4: memref<8x1xf32, #tpu.memory_space<vmem>>, %arg5: memref<8x512xf32, #tpu.memory_space<vmem>>, %arg6: memref<8x512xf32, #tpu.memory_space<vmem>>) attributes {dimension_semantics = [#tpu.dimension_semantics<parallel>, #tpu.dimension_semantics<arbitrary>], iteration_bounds = array<i64: 2, 1>, scalar_prefetch = 0 : i64, scratch_operands = 1 : i64, tpu.core_type = #tpu.core_type<tc>, window_params = [{transform_indices = @transform_0, window_bounds = array<i64: 8, 27>}, {transform_indices = @transform_1, window_bounds = array<i64: 27, 512>}, {pipeline_mode = #tpu.pipeline_mode<synchronous>, transform_indices = @transform_2, window_bounds = array<i64: 8, 1>}, {transform_indices = @transform_3, window_bounds = array<i64: 8, 512>}]} {
    %c0_i32 = arith.constant 0 : i32
    %0 = arith.cmpi eq, %arg1, %c0_i32 : i32
    %1 = arith.extui %0 : i1 to i32
    %c0_i32_0 = arith.constant 0 : i32
    %2 = arith.cmpi ne, %1, %c0_i32_0 : i32
    scf.if %2 {
      %cst_10 = arith.constant 0.000000e+00 : f32
      %12 = vector.broadcast %cst_10 : f32 to vector<8x512xf32>
      %c0_11 = arith.constant 0 : index
      %c0_12 = arith.constant 0 : index
      %13 = vector.load %arg6[%c0_11, %c0_12] : memref<8x512xf32, #tpu.memory_space<vmem>>, vector<8x512xf32>
      tpu.vector_store %arg6[%c0_11, %c0_12], %12 {strides = array<i32>} : memref<8x512xf32, #tpu.memory_space<vmem>>, vector<8x512xf32>,
    } else {
    }
    %c0 = arith.constant 0 : index
    %c0_1 = arith.constant 0 : index
    %3 = vector.load %arg6[%c0, %c0_1] : memref<8x512xf32, #tpu.memory_space<vmem>>, vector<8x512xf32>
    %c0_2 = arith.constant 0 : index
    %c0_3 = arith.constant 0 : index
    %4 = vector.load %arg2[%c0_2, %c0_3] : memref<8x27xbf16, #tpu.memory_space<vmem>>, vector<8x27xbf16>
    %c0_4 = arith.constant 0 : index
    %c0_5 = arith.constant 0 : index
    %5 = vector.load %arg3[%c0_4, %c0_5] : memref<27x512xbf16, #tpu.memory_space<vmem>>, vector<27x512xbf16>
    %cst = arith.constant dense<0.000000e+00> : vector<8x512xf32>
    %6 = tpu.matmul %4, %5, %cst {dimension_numbers = #tpu.dot_dimension_numbers<[1], [0], [0], [1], [0, 0, 1, 1], [], []>} : vector<8x27xbf16>, vector<27x512xbf16>, vector<8x512xf32> -> vector<8x512xf32>
    %7 = arith.addf %3, %6 : vector<8x512xf32>
    %c0_6 = arith.constant 0 : index
    %c0_7 = arith.constant 0 : index
    %8 = vector.load %arg6[%c0_6, %c0_7] : memref<8x512xf32, #tpu.memory_space<vmem>>, vector<8x512xf32>
    tpu.vector_store %arg6[%c0_6, %c0_7], %7 {strides = array<i32>} : memref<8x512xf32, #tpu.memory_space<vmem>>, vector<8x512xf32>,
    %c0_i32_8 = arith.constant 0 : i32
    %9 = arith.cmpi eq, %arg1, %c0_i32_8 : i32
    %10 = arith.extui %9 : i1 to i32
    %c0_i32_9 = arith.constant 0 : i32
    %11 = arith.cmpi ne, %10, %c0_i32_9 : i32
    scf.if %11 {
      %c0_10 = arith.constant 0 : index
      %c0_11 = arith.constant 0 : index
      %12 = vector.load %arg6[%c0_10, %c0_11] : memref<8x512xf32, #tpu.memory_space<vmem>>, vector<8x512xf32>
      %c0_12 = arith.constant 0 : index
      %c0_13 = arith.constant 0 : index
      %13 = vector.load %arg4[%c0_12, %c0_13] : memref<8x1xf32, #tpu.memory_space<vmem>>, vector<8x1xf32>
      %14 = vector.broadcast %13 : vector<8x1xf32> to vector<8x512xf32>
      %15 = arith.addf %12, %14 : vector<8x512xf32>
      %cst_14 = arith.constant 0.000000e+00 : f32
      %16 = vector.broadcast %cst_14 : f32 to vector<8x512xf32>
      %17 = arith.maximumf %15, %16 : vector<8x512xf32>
      %c0_15 = arith.constant 0 : index
      %c0_16 = arith.constant 0 : index
      %18 = vector.load %arg5[%c0_15, %c0_16] : memref<8x512xf32, #tpu.memory_space<vmem>>, vector<8x512xf32>
      tpu.vector_store %arg5[%c0_15, %c0_16], %17 {strides = array<i32>} : memref<8x512xf32, #tpu.memory_space<vmem>>, vector<8x512xf32>,
    } else {
    }
    return
  }
  func.func @transform_0(%arg0: i32, %arg1: i32) -> (i32, i32) {
    %c0_i32 = arith.constant 0 : i32
    %c0_i32_0 = arith.constant 0 : i32
    return %c0_i32, %arg1 : i32, i32
  }
  func.func @transform_1(%arg0: i32, %arg1: i32) -> (i32, i32) {
    %c0_i32 = arith.constant 0 : i32
    return %arg1, %arg0 : i32, i32
  }
  func.func @transform_2(%arg0: i32, %arg1: i32) -> (i32, i32) {
    %c0_i32 = arith.constant 0 : i32
    %c0_i32_0 = arith.constant 0 : i32
    %c0_i32_1 = arith.constant 0 : i32
    return %c0_i32, %c0_i32_0 : i32, i32
  }
  func.func @transform_3(%arg0: i32, %arg1: i32) -> (i32, i32) {
    %c0_i32 = arith.constant 0 : i32
    %c0_i32_0 = arith.constant 0 : i32
    return %c0_i32, %arg0 : i32, i32
  }
}

</mosaic_0001>

<llo_original>
// kernel: tpu_custom_call.1
$region0: #{tpu_custom_call.1}
  #allocation0 [shape = 'u32[]', space=smem, size = 0x4, offset = 0x4, fixed_abs, tag = 'smem constant byte address 0x4 - core index']
  #allocation1 [shape = 'u32[144,128]{1,0:T(1,128)}', space=vmem, size = 0x12000, scoped, tag = 'internal scratch']
  #allocation2 [shape = 'f32[8,512]{1,0:T(8,128)}', space=vmem, size = 0x4000, scoped, tag = 'scratch operand']
  %s0 = inlined_call_operand.vmem [shape: bf16[8,27], index: 0, kind: input, shape index: {}]
  %s1 = inlined_call_operand.hbm [shape: bf16[27,1024], index: 1, kind: input, shape index: {}]
  %s2 = inlined_call_operand.vmem [shape: f32[8,1], index: 2, kind: input, shape index: {}]
  %s3 = inlined_call_operand.hbm [shape: f32[8,1024], index: 3, kind: output, shape index: {}]
  %s4 = sld [smem:[#allocation0]]
  $region57: #{tpu_custom_call.1} parent=0
    _
  %s6 = ssub.s32 1, %s4
  %s7 = scalar_select 0, %s6, %s4
  $region1: #{tpu_custom_call.1} parent=0
    #allocation3 [shape = 'u8[65536]{0}', space=vmem, size = 0x10000, scoped, tag = 'input window, operand 1']
    #allocation4 [shape = 's32[2]{0}', space=sflag, size = 0x8, scoped, tag = 'scoped memory for tpu_custom_call.1']
    #allocation5 [shape = 's32[2]{0}', space=sflag, size = 0x8, scoped, tag = 'scoped memory for tpu_custom_call.1']
    #allocation6 [shape = 'u8[32768]{0}', space=vmem, size = 0x8000, scoped, tag = 'output window, operand 0']
    %8 = vsyncpa [#allocation4], 0
    %s9 = scalar_lea.sflag [#allocation4], 1
    %10 = vsyncpa %s9, 0
    %11 = vsyncpa [#allocation5], 0
    %s12 = scalar_lea.sflag [#allocation5], 1
    %13 = vsyncpa %s12, 0
    loop: start=0, step=1, limit=4
    $region2: #{tpu_custom_call.1} parent=1 // loop_pre_header
      _
    $region3: #{tpu_custom_call.1} parent=1 // loop_header
      %s15 = sphi 0, %s19
      %p16 = scmp.ge.s32.totalorder %s15, 4
      %s22 = sphi 0, %s34
      %s23 = sphi 0, %s30
      %s24 = sphi 0, %s22
      %s25 = sphi 0, %s23
      %s26 = sphi 0, %s24
      %s27 = sphi 0, %s25
      %s37 = sphi 0, %s39
      %s40 = sphi 0, %s37
      %s41 = sphi 0, %s40
      %s57 = sphi 0, %s41
      %s65 = sphi 0, %s67
      %s68 = sphi 0, %s65
      %s69 = sphi 0, %s68
      %s85 = sphi 0, %s69
      %s89 = sphi 0, %s89
      %s91 = sphi 0, %s89
      %s92 = sphi 0, %s91
      %s106 = sphi 0, %s92
      %s112 = sphi 0, %s114
      %s115 = sphi 0, %s112
      %s116 = sphi 0, %s115
      %s132 = sphi 0, %s116
    $region4: #{tpu_custom_call.1} parent=1 // loop_header_branch
      %18 = sbr.rel (%p16) target = $region8
    $region5: #{tpu_custom_call.1} parent=1 // loop_body
      %s20 = ssub.s32 %s15, 1
      %s21 = ssub.s32 %s15, 2
      %s28 = sadd.s32 1, %s23
      %p29 = scmp.ge.s32.totalorder %s28, 1
      %s30 = scalar_select %p29, 0, %s28
      %s31 = sadd.s32 1, %s22
      %s32 = scalar_select %p29, %s31, %s22
      %p33 = scmp.ge.s32.totalorder %s32, 2
      %s34 = scalar_select %p33, 0, %s32
      %s35 = ssub.s32 %s23, %s30
      %p36 = scmp.eq.s32.totalorder %s35, 0
      %s38 = sadd.s32 %s37, 1
      %s39 = scalar_select %p36, %s37, %s38
      %p42 = pneg %p36
      %p43 = scmp.eq.s32.totalorder %s15, 1
      %p44 = por %p42, %p43
      %p45 = scmp.ne.s32.totalorder %s37, %s40
      %p46 = scmp.eq.s32.totalorder %s15, 0
      %p47 = por %p45, %p46
      %p48 = scmp.ne.s32.totalorder %s37, %s40
      %p49 = scmp.eq.s32.totalorder %s20, 1
      %p50 = por %p48, %p49
      %p51 = scmp.ne.s32.totalorder %s40, %s41
      %p52 = scmp.eq.s32.totalorder %s20, 0
      %p53 = por %p51, %p52
      %p54 = scmp.ne.s32.totalorder %s40, %s41
      %p55 = scmp.eq.s32.totalorder %s21, 1
      %p56 = por %p54, %p55
      %p58 = scmp.ne.s32.totalorder %s41, %s57
      %p59 = scmp.eq.s32.totalorder %s21, 0
      %p60 = por %p58, %p59
      %s61 = ssub.s32 %s23, %s30
      %s62 = ssub.s32 %s22, %s34
      %s63 = sor.u32 %s61, %s62
      %p64 = scmp.eq.s32.totalorder %s63, 0
      %s66 = sadd.s32 %s65, 1
      %s67 = scalar_select %p64, %s65, %s66
      %p70 = pneg %p64
      %p71 = scmp.eq.s32.totalorder %s15, 1
      %p72 = por %p70, %p71
      %p73 = scmp.ne.s32.totalorder %s65, %s68
      %p74 = scmp.eq.s32.totalorder %s15, 0
      %p75 = por %p73, %p74
      %p76 = scmp.ne.s32.totalorder %s65, %s68
      %p77 = scmp.eq.s32.totalorder %s20, 1
      %p78 = por %p76, %p77
      %p79 = scmp.ne.s32.totalorder %s68, %s69
      %p80 = scmp.eq.s32.totalorder %s20, 0
      %p81 = por %p79, %p80
      %p82 = scmp.ne.s32.totalorder %s68, %s69
      %p83 = scmp.eq.s32.totalorder %s21, 1
      %p84 = por %p82, %p83
      %p86 = scmp.ne.s32.totalorder %s69, %s85
      %p87 = scmp.eq.s32.totalorder %s21, 0
      %p88 = por %p86, %p87
      %s90 = sadd.s32 %s89, 1
      %p93 = scmp.eq.s32.totalorder %s15, 1
      %p94 = scmp.ne.s32.totalorder %s89, %s91
      %p95 = scmp.eq.s32.totalorder %s15, 0
      %p96 = por %p94, %p95
      %p97 = scmp.ne.s32.totalorder %s89, %s91
      %p98 = scmp.eq.s32.totalorder %s20, 1
      %p99 = por %p97, %p98
      %p100 = scmp.ne.s32.totalorder %s91, %s92
      %p101 = scmp.eq.s32.totalorder %s20, 0
      %p102 = por %p100, %p101
      %p103 = scmp.ne.s32.totalorder %s91, %s92
      %p104 = scmp.eq.s32.totalorder %s21, 1
      %p105 = por %p103, %p104
      %p107 = scmp.ne.s32.totalorder %s92, %s106
      %p108 = scmp.eq.s32.totalorder %s21, 0
      %p109 = por %p107, %p108
      %s110 = ssub.s32 %s22, %s34
      %p111 = scmp.eq.s32.totalorder %s110, 0
      %s113 = sadd.s32 %s112, 1
      %s114 = scalar_select %p111, %s112, %s113
      %p117 = pneg %p111
      %p118 = scmp.eq.s32.totalorder %s15, 1
      %p119 = por %p117, %p118
      %p120 = scmp.ne.s32.totalorder %s112, %s115
      %p121 = scmp.eq.s32.totalorder %s15, 0
      %p122 = por %p120, %p121
      %p123 = scmp.ne.s32.totalorder %s112, %s115
      %p124 = scmp.eq.s32.totalorder %s20, 1
      %p125 = por %p123, %p124
      %p126 = scmp.ne.s32.totalorder %s115, %s116
      %p127 = scmp.eq.s32.totalorder %s20, 0
      %p128 = por %p126, %p127
      %p129 = scmp.ne.s32.totalorder %s115, %s116
      %p130 = scmp.eq.s32.totalorder %s21, 1
      %p131 = por %p129, %p130
      %p133 = scmp.ne.s32.totalorder %s116, %s132
      %p134 = scmp.eq.s32.totalorder %s21, 0
      %p135 = por %p133, %p134
      %p136 = scmp.le.s32.totalorder 1, %s15
      %p137 = scmp.lt.s32.totalorder %s15, 3
      %p138 = pnand %p136, %p137
      %p139 = pneg %p138
      // Predicated region
      $region9: #{tpu_custom_call.1} parent=5 // pred_check
        _
      $region10: #{tpu_custom_call.1} parent=5 // pred_check_branch
        %141 = sbr.rel (%p138) target = $region12
      $region11: #{tpu_custom_call.1} parent=5 // pred_region
        %s142 = ssub.s32 %s15, 1
        // Predicated region
        $region13: #{tpu_custom_call.1} parent=11 // pred_check
          %p143 = pneg %p53
        $region14: #{tpu_custom_call.1} parent=11 // pred_check_branch
          %145 = sbr.rel (%p143) target = $region16
        $region15: #{tpu_custom_call.1} parent=11 // pred_region
          %p146 = scmp.lt.s32.totalorder %s25, 0
          %s147 = scalar_select %p146, %s25, 0
          %s148 = smul.addr %s147, 4
          %s149 = scalar_lea.vmem %s0, %s148
        $region16: #{tpu_custom_call.1} parent=11 // pred_fallthru
          _
        // Predicated region
        $region17: #{tpu_custom_call.1} parent=11 // pred_check
          %p150 = pneg %p102
        $region18: #{tpu_custom_call.1} parent=11 // pred_check_branch
          %152 = sbr.rel (%p150) target = $region20
        $region19: #{tpu_custom_call.1} parent=11 // pred_region
          _
        $region20: #{tpu_custom_call.1} parent=11 // pred_fallthru
          _
      $region12: #{tpu_custom_call.1} parent=5 // pred_fallthru
        _
      %p153 = scmp.lt.s32.totalorder %s15, 2
      // Predicated region
      $region21: #{tpu_custom_call.1} parent=5 // pred_check
        %p154 = pneg %p153
      $region22: #{tpu_custom_call.1} parent=5 // pred_check_branch
        %156 = sbr.rel (%p154) target = $region24
      $region23: #{tpu_custom_call.1} parent=5 // pred_region
        // Predicated region
        $region25: #{tpu_custom_call.1} parent=23 // pred_check
          %p157 = pneg %p75
        $region26: #{tpu_custom_call.1} parent=23 // pred_check_branch
          %159 = sbr.rel (%p157) target = $region28
        $region27: #{tpu_custom_call.1} parent=23 // pred_region
          %s160 = sand.u32 %s65, 1
          %s161 = scalar_lea.sflag [#allocation4], %s160
          %s162 = sand.u32 %s65, 1
          %s163 = smul.addr %s162, 64
          %s164 = scalar_lea.vmem [#allocation3], %s163
          %s165 = smul.u32 4, %s23
          %s166 = smul.u32 4, %s22
          %s168 = ssub.s32 1024, 1024
          %169 = vsyncadd %s161, %s168
          %s170 = smul.addr %s165, 8
          %s171 = sadd.s32 %s166, %s170
          %s172 = smul.addr %s171, 64
          %s173 = scalar_lea.hbm %s1, %s172
          %s174 = sshll.u32 %s164, 4
          %s175 = int_to_ptr.vmem [resolvable:$true] %s174
          %180 = dma.hbm_to_vmem [thread:$0]  %s173, 1024, %s175, %s161, 512, 256, 16
        $region28: #{tpu_custom_call.1} parent=23 // pred_fallthru
          _
      $region24: #{tpu_custom_call.1} parent=5 // pred_fallthru
        _
      %p181 = scmp.le.s32.totalorder 1, %s15
      %p182 = scmp.lt.s32.totalorder %s15, 3
      %p183 = pnand %p181, %p182
      %p184 = pneg %p183
      // Predicated region
      $region29: #{tpu_custom_call.1} parent=5 // pred_check
        _
      $region30: #{tpu_custom_call.1} parent=5 // pred_check_branch
        %186 = sbr.rel (%p183) target = $region32
      $region31: #{tpu_custom_call.1} parent=5 // pred_region
        %s187 = ssub.s32 %s15, 1
        %s188 = sand.u32 %s68, 1
        %s189 = scalar_lea.sflag [#allocation4], %s188
        %s190 = sand.u32 %s68, 1
        %s191 = smul.addr %s190, 64
        %s192 = scalar_lea.vmem [#allocation3], %s191
        // Predicated region
        $region33: #{tpu_custom_call.1} parent=31 // pred_check
          %p193 = pneg %p81
        $region34: #{tpu_custom_call.1} parent=31 // pred_check_branch
          %195 = sbr.rel (%p193) target = $region36
        $region35: #{tpu_custom_call.1} parent=31 // pred_region
          %196 = dma.done %s189, 1024
        $region36: #{tpu_custom_call.1} parent=31 // pred_fallthru
          _
        %p197 = scmp.lt.s32.totalorder %s25, 0
        %s198 = scalar_select %p197, %s25, 0
        %s199 = smul.addr %s198, 4
        %s200 = scalar_lea.vmem %s0, %s199
        %p201 = pneg %p53
        %p202 = pneg %p50
        %s203 = sand.u32 %s68, 1
        %s204 = scalar_lea.sflag [#allocation4], %s203
        %s205 = sand.u32 %s68, 1
        %s206 = smul.addr %s205, 64
        %s207 = scalar_lea.vmem [#allocation3], %s206
        %p208 = pneg %p81
        %p209 = pneg %p78
        %p210 = pneg %p102
        %p211 = pneg %p99
        %p212 = pneg %p128
        %p213 = pneg %p125
        %s214 = sand.u32 %s115, 1
        %s215 = scalar_lea.sflag [#allocation5], %s214
        %s216 = sand.u32 %s115, 1
        %s217 = smul.addr %s216, 32
        %s218 = scalar_lea.vmem [#allocation6], %s217
        %p219 = scmp.lt.s32.totalorder %s25, 0
        %s220 = scalar_select %p219, %s25, 0
        %s221 = smul.addr %s220, 4
        %s222 = scalar_lea.vmem %s0, %s221
        %s223 = smul.u32 4, %s25
        %s224 = smul.u32 4, %s24
        %s225 = smul.u32 4, %s24
        %p227 = scmp.eq.s32.totalorder %s25, 0
        // Predicated region
        $region37: #{tpu_custom_call.1} parent=31 // pred_check
          %p228 = pneg %p227
        $region38: #{tpu_custom_call.1} parent=31 // pred_check_branch
          %230 = sbr.rel (%p228) target = $region40
        $region39: #{tpu_custom_call.1} parent=31 // pred_region
          %231 = vst [vmem:[#allocation2] sm:$0xff] 0.0
          %232 = vst [vmem:[#allocation2 + $0x8] sm:$0xff] 0.0
          %233 = vst [vmem:[#allocation2 + $0x10] sm:$0xff] 0.0
          %234 = vst [vmem:[#allocation2 + $0x18] sm:$0xff] 0.0
        $region40: #{tpu_custom_call.1} parent=31 // pred_fallthru
          _
        %v235 = vld [vmem:[#allocation2] sm:$0xff]
        %v236 = vld [vmem:[#allocation2 + $0x8] sm:$0xff]
        %v237 = vld [vmem:[#allocation2 + $0x10] sm:$0xff]
        %v238 = vld [vmem:[#allocation2 + $0x18] sm:$0xff]
        %v239 = vld [vmem:[%s222] sm:$0xf]
        %v240 = vld [vmem:[%s192] sm:$0xff]
        %v241 = vld [vmem:[%s192 + $0x8] sm:$0xff]
        %v242 = vld [vmem:[%s192 + $0x10] sm:$0xff]
        %v243 = vld [vmem:[%s192 + $0x18] sm:$0xff]
        %v244 = vld [vmem:[%s192 + $0x20] sm:$0xff]
        %v245 = vld [vmem:[%s192 + $0x28] sm:$0xff]
        %v246 = vld [vmem:[%s192 + $0x30] sm:$0x33]
        %v247 = vld [vmem:[%s192 + $0x38] sm:$0x33]
        %v256 = vunpack.c.l.b16 %v240
        %v257 = vunpack.c.h.b16 %v240
        %v258 = vunpack.c.l.b16 %v241
        %v259 = vunpack.c.h.b16 %v241
        %v260 = vunpack.c.l.b16 %v242
        %v261 = vunpack.c.h.b16 %v242
        %v262 = vunpack.c.l.b16 %v243
        %v263 = vunpack.c.h.b16 %v243
        %v264 = vunpack.c.l.b16 %v244
        %v265 = vunpack.c.h.b16 %v244
        %v266 = vunpack.c.l.b16 %v245
        %v267 = vunpack.c.h.b16 %v245
        %v268 = vunpack.c.l.b16 %v246
        %v269 = vunpack.c.h.b16 %v246
        %v270 = vunpack.c.l.b16 %v247
        %v271 = vunpack.c.h.b16 %v247
        %v272 = vpack.c.b16 %v260, %v256
        %v273 = vpack.c.b16 %v261, %v257
        %v274 = vpack.c.b16 %v262, %v258
        %v275 = vpack.c.b16 %v263, %v259
        %v276 = vpack.c.b16 %v268, %v264
        %v277 = vpack.c.b16 %v269, %v265
        %v278 = vpack.c.b16 %v270, %v266
        %v279 = vpack.c.b16 %v271, %v267
        %vm284 = vcmask 220160
        %v286 = vsel %vm284, %v239, 0
        %vm288 = vcmask 1044480
        %vm289 = vcmask 1045504
        %v290 = vsel %vm288, 4294967295, 65535
        %v291 = vsel %vm289, %v290, 0
        %v293 = vand.u32 %v276, %v291
        %v296 = vand.u32 %v277, %v291
        %v299 = vand.u32 %v278, %v291
        %v302 = vand.u32 %v279, %v291
        %304 = vmatprep.subr.bf16.mxu0 %v273
        %305 = vmatpush1.bf16.msra.mxu0 %v272
        %306 = vmatprep.subr.bf16.mxu0 %v296
        %307 = vmatpush1.bf16.msra.mxu0 %v293
        %308 = vmatprep.subr.bf16.mxu0 0
        %309 = vmatpush1.bf16.msra.mxu0 0
        %310 = vmatprep.subr.bf16.mxu0 0
        %311 = vmatpush1.bf16.msra.mxu0 0
        %312 = vmatprep.subr.bf16.mxu0 0
        %313 = vmatpush1.bf16.msra.mxu0 0
        %314 = vmatprep.subr.bf16.mxu0 0
        %315 = vmatpush1.bf16.msra.mxu0 0
        %316 = vmatprep.subr.bf16.mxu0 0
        %317 = vmatpush1.bf16.msra.mxu0 0
        %318 = vmatprep.subr.bf16.mxu0 0
        %319 = vmatpush1.bf16.msra.mxu0 0
        %320 = vmatprep.subr.bf16.mxu0 0
        %321 = vmatpush1.bf16.msra.mxu0 0
        %322 = vmatprep.subr.bf16.mxu0 0
        %323 = vmatpush1.bf16.msra.mxu0 0
        %324 = vmatprep.subr.bf16.mxu0 0
        %325 = vmatpush1.bf16.msra.mxu0 0
        %326 = vmatprep.subr.bf16.mxu0 0
        %327 = vmatpush1.bf16.msra.mxu0 0
        %328 = vmatprep.subr.bf16.mxu0 0
        %329 = vmatpush1.bf16.msra.mxu0 0
        %330 = vmatprep.subr.bf16.mxu0 0
        %331 = vmatpush1.bf16.msra.mxu0 0
        %332 = vmatprep.subr.bf16.mxu0 0
        %333 = vmatpush1.bf16.msra.mxu0 0
        %334 = vmatprep.subr.bf16.mxu0 0
        %335 = vmatpush1.bf16.msra.mxu0 0
        %336 = vmatprep.mubr.bf16.mxu0 0
        %337 = vmatmul.mubr.bf16.gmra.mrb[0].mxu0 %v286
        %v338 = vpop.f32.mrb[0].mxu0
        %v339 = vadd.f32 0.0, %v338
        %v340 = vpop.f32.mrb[0].mxu0
        %v341 = vadd.f32 0.0, %v340
        %v342 = vpop.f32.mrb[0].mxu0
        %v343 = vpop.f32.mrb[0].mxu0
        %344 = vdwg.mxu0
        %345 = vmatprep.subr.bf16.mxu0 %v275
        %346 = vmatpush1.bf16.msra.mxu0 %v274
        %347 = vmatprep.subr.bf16.mxu0 %v302
        %348 = vmatpush1.bf16.msra.mxu0 %v299
        %349 = vmatprep.subr.bf16.mxu0 0
        %350 = vmatpush1.bf16.msra.mxu0 0
        %351 = vmatprep.subr.bf16.mxu0 0
        %352 = vmatpush1.bf16.msra.mxu0 0
        %353 = vmatprep.subr.bf16.mxu0 0
        %354 = vmatpush1.bf16.msra.mxu0 0
        %355 = vmatprep.subr.bf16.mxu0 0
        %356 = vmatpush1.bf16.msra.mxu0 0
        %357 = vmatprep.subr.bf16.mxu0 0
        %358 = vmatpush1.bf16.msra.mxu0 0
        %359 = vmatprep.subr.bf16.mxu0 0
        %360 = vmatpush1.bf16.msra.mxu0 0
        %361 = vmatprep.subr.bf16.mxu0 0
        %362 = vmatpush1.bf16.msra.mxu0 0
        %363 = vmatprep.subr.bf16.mxu0 0
        %364 = vmatpush1.bf16.msra.mxu0 0
        %365 = vmatprep.subr.bf16.mxu0 0
        %366 = vmatpush1.bf16.msra.mxu0 0
        %367 = vmatprep.subr.bf16.mxu0 0
        %368 = vmatpush1.bf16.msra.mxu0 0
        %369 = vmatprep.subr.bf16.mxu0 0
        %370 = vmatpush1.bf16.msra.mxu0 0
        %371 = vmatprep.subr.bf16.mxu0 0
        %372 = vmatpush1.bf16.msra.mxu0 0
        %373 = vmatprep.subr.bf16.mxu0 0
        %374 = vmatpush1.bf16.msra.mxu0 0
        %375 = vmatprep.subr.bf16.mxu0 0
        %376 = vmatpush1.bf16.msra.mxu0 0
        %377 = vmatprep.mubr.bf16.mxu0 0
        %378 = vmatmul.mubr.bf16.gmra.mrb[0].mxu0 %v286
        %v379 = vpop.f32.mrb[0].mxu0
        %v380 = vadd.f32 0.0, %v379
        %v381 = vpop.f32.mrb[0].mxu0
        %v382 = vadd.f32 0.0, %v381
        %v383 = vpop.f32.mrb[0].mxu0
        %v384 = vpop.f32.mrb[0].mxu0
        %385 = vdwg.mxu0
        %v386 = vadd.f32 %v235, %v339
        %v387 = vadd.f32 %v236, %v341
        %v388 = vadd.f32 %v237, %v380
        %v389 = vadd.f32 %v238, %v382
        %390 = vst [vmem:[#allocation2] sm:$0xff] %v386
        %391 = vst [vmem:[#allocation2 + $0x8] sm:$0xff] %v387
        %392 = vst [vmem:[#allocation2 + $0x10] sm:$0xff] %v388
        %393 = vst [vmem:[#allocation2 + $0x18] sm:$0xff] %v389
        // Predicated region
        $region41: #{tpu_custom_call.1} parent=31 // pred_check
          %p394 = pneg %p227
        $region42: #{tpu_custom_call.1} parent=31 // pred_check_branch
          %396 = sbr.rel (%p394) target = $region44
        $region43: #{tpu_custom_call.1} parent=31 // pred_region
          %v397 = vld [vmem:[#allocation2] sm:$0xff]
          %v398 = vld [vmem:[#allocation2 + $0x8] sm:$0xff]
          %v399 = vld [vmem:[#allocation2 + $0x10] sm:$0xff]
          %v400 = vld [vmem:[#allocation2 + $0x18] sm:$0xff]
          %v401 = vld [vmem:[%s2] sm:$0xff]
          %403 = vset.pattern.permute.xlu0 0
          %404 = vperm.xlu0 %403, %v401
          %v405 = vpop.permute.xlu0 %404
          %v407 = vadd.f32 %v397, %v405
          %v408 = vadd.f32 %v398, %v405
          %v409 = vadd.f32 %v399, %v405
          %v410 = vadd.f32 %v400, %v405
          %v411 = vmax.f32 %v407, 0.0
          %v412 = vmax.f32 %v408, 0.0
          %v413 = vmax.f32 %v409, 0.0
          %v414 = vmax.f32 %v410, 0.0
          %415 = vst [vmem:[%s218] sm:$0xff] %v411
          %416 = vst [vmem:[%s218 + $0x8] sm:$0xff] %v412
          %417 = vst [vmem:[%s218 + $0x10] sm:$0xff] %v413
          %418 = vst [vmem:[%s218 + $0x18] sm:$0xff] %v414
        $region44: #{tpu_custom_call.1} parent=31 // pred_fallthru
          _
        %s419 = sand.u32 %s115, 1
        %s420 = scalar_lea.sflag [#allocation5], %s419
        %s421 = sand.u32 %s115, 1
        %s422 = smul.addr %s421, 32
        %s423 = scalar_lea.vmem [#allocation6], %s422
        // Predicated region
        $region45: #{tpu_custom_call.1} parent=31 // pred_check
          %p424 = pneg %p125
        $region46: #{tpu_custom_call.1} parent=31 // pred_check_branch
          %426 = sbr.rel (%p424) target = $region48
        $region47: #{tpu_custom_call.1} parent=31 // pred_region
          %s427 = smul.u32 4, %s24
          %s429 = ssub.s32 512, 512
          %430 = vsyncadd %s420, %s429
          %s431 = smul.addr %s427, 128
          %s432 = scalar_lea.hbm %s3, %s431
          %s434 = sshll.u32 %s423, 4
          %s435 = int_to_ptr.vmem [resolvable:$true] %s434
          %437 = dma.vmem_to_hbm [thread:$0]  %s435, 512, %s432, %s420
        $region48: #{tpu_custom_call.1} parent=31 // pred_fallthru
          _
      $region32: #{tpu_custom_call.1} parent=5 // pred_fallthru
        _
      %p438 = scmp.le.s32.totalorder 2, %s15
      // Predicated region
      $region49: #{tpu_custom_call.1} parent=5 // pred_check
        %p439 = pneg %p438
      $region50: #{tpu_custom_call.1} parent=5 // pred_check_branch
        %441 = sbr.rel (%p439) target = $region52
      $region51: #{tpu_custom_call.1} parent=5 // pred_region
        %s442 = ssub.s32 %s15, 2
        // Predicated region
        $region53: #{tpu_custom_call.1} parent=51 // pred_check
          %p443 = pneg %p131
        $region54: #{tpu_custom_call.1} parent=51 // pred_check_branch
          %445 = sbr.rel (%p443) target = $region56
        $region55: #{tpu_custom_call.1} parent=51 // pred_region
          %s446 = sand.u32 %s116, 1
          %s447 = scalar_lea.sflag [#allocation5], %s446
          %s448 = sand.u32 %s116, 1
          %s449 = smul.addr %s448, 32
          %s450 = scalar_lea.vmem [#allocation6], %s449
          %451 = dma.done %s447, 512
        $region56: #{tpu_custom_call.1} parent=51 // pred_fallthru
          _
      $region52: #{tpu_custom_call.1} parent=5 // pred_fallthru
        _
    $region6: #{tpu_custom_call.1} parent=1 // loop_footer
      %s19 = sadd.s32 1, %s15
    $region7: #{tpu_custom_call.1} parent=1 // loop_footer_branch
      %14 = sbr.rel target = $region3
    $region8: #{tpu_custom_call.1} parent=1 // loop_exit
      _
    %452 = vsyncpa [#allocation4], 1
    %s453 = scalar_lea.sflag [#allocation4], 1
    %454 = vsyncpa %s453, 1
    %455 = vsyncpa [#allocation5], 1
    %s456 = scalar_lea.sflag [#allocation5], 1
    %457 = vsyncpa %s456, 1

</llo_original>
